<compile_context>
chip_gen: v6e
topology: v6e:2x2x1
jax: 0.10.0
libtpu: 0.0.40
codegen_flags: <defaults>
</compile_context>

<pallas_src>
import functools

import jax
import jax.numpy as jnp
from jax.experimental import pallas as pl
from jax.experimental.pallas import tpu as pltpu


def _conditional_kernel(obs_ref, cond_ref, w_obs_ref, w_cond_ref, b_ref,
                        out_ref, *, width, half, hw_tile, bn, w_pow2):
    # obs_ref/cond_ref: (bn, C, HWt)   w_*: (Dout, C)   b: (Dout, 1)
    # out_ref:          (bn, Dout, HWt)
    # In-kernel right-half predicate: flattened pixel index -> column (idx % W).
    # Generated on the VPU every step (free filler under the DMA) instead of
    # being DMA'd as an extra input.
    j = pl.program_id(1)
    idx = j * hw_tile + jax.lax.broadcasted_iota(jnp.int32, (1, hw_tile), 1)
    col = (idx & (width - 1)) if w_pow2 else (idx % width)
    replace = col >= half                                    # (1, HWt)

    w_obs = w_obs_ref[...]
    w_cond = w_cond_ref[...]
    b = b_ref[...]
    for i in range(bn):                                      # bn <= 8, static
        obs = obs_ref[i]                                     # (C, HWt)
        cond_mod = jnp.where(replace, obs, cond_ref[i])      # right-half swap
        out = (jnp.dot(w_obs, obs, preferred_element_type=jnp.float32)
               + jnp.dot(w_cond, cond_mod, preferred_element_type=jnp.float32)
               + b)                                          # (Dout, HWt)
        out_ref[i] = out.astype(out_ref.dtype)


def _round_up(x, m):
    return ((x + m - 1) // m) * m


def _choose_blocks(n, c, hw, *, max_tile=32768, target_read_bytes=2 << 20):
    # hw tile: full HW when small (single lane-dense block), otherwise a
    # 128-multiple tile with a cdiv grid (Pallas handles the ragged tail), so
    # blocks stay bounded regardless of frame size (never VMEM-OOM on v7x).
    if hw <= max_tile:
        hw_tile = hw
    else:
        n_blk = pl.cdiv(hw, max_tile)
        hw_tile = _round_up(pl.cdiv(hw, n_blk), 128)
    # Batch blocking: amortize the ~0.35 us per-step overhead by moving
    # >= ~2 MiB of reads per grid step when HW alone is too small.  bn is a
    # divisor of n (no ragged batch) and <= 8 (static unroll in the kernel).
    per_image_read = 2 * c * hw_tile * 4
    bn = max(1, min(8, n, target_read_bytes // per_image_read))
    while n % bn:
        bn -= 1
    # Megacore balance (v7x has 2 TCs): keep >= 2 grid steps whenever possible.
    if (n // bn) * pl.cdiv(hw, hw_tile) < 2:
        if bn > 1:
            bn = max(1, bn // 2)
            while n % bn:
                bn -= 1
        elif hw_tile > 128 and hw_tile % 256 == 0:
            hw_tile //= 2
    return bn, hw_tile


def conditional_forward(obs_nchw, cond_nchw, weight, bias):
    """Conditional.forward with D := 1x1 Conv2d(2C -> Dout) + bias.

    obs/cond: (N, C, H, W) f32.  weight: (Dout, 2C).  bias: (Dout,).
    Returns D(concat([obs, cond_with_right_half_replaced], axis=1)).
    """
    n, c, h, w = obs_nchw.shape
    d_out = weight.shape[0]
    hw = h * w
    half = w // 2

    # Pure views of NCHW (channels on sublanes, pixels on the lane axis):
    # no wrapper transposes, no extra HBM passes.
    obs_p = obs_nchw.reshape(n, c, hw)
    cond_p = cond_nchw.reshape(n, c, hw)

    # Split the 1x1-conv weight over the channel concat: first C input channels
    # act on obs, last C act on the (modified) condition.
    w_obs = weight[:, :c]                 # (Dout, C)
    w_cond = weight[:, c:]                # (Dout, C)
    b2 = bias.reshape(d_out, 1)           # broadcasts along the HW lane axis

    bn, hw_tile = _choose_blocks(n, c, hw)
    grid = (n // bn, pl.cdiv(hw, hw_tile))

    # Explicit VMEM cap sized from the double-buffered block footprint
    # (portable: covers v5e's 16 MiB scoped default, well under v7x's 64 MiB).
    c_pad = _round_up(c, 8)
    d_pad = _round_up(d_out, 8)
    block_bytes = bn * hw_tile * 4 * (2 * c_pad + d_pad)
    vmem_limit = int(min(max(3 * block_bytes + (4 << 20), 32 << 20), 60 << 20))

    kernel = functools.partial(
        _conditional_kernel, width=w, half=half, hw_tile=hw_tile, bn=bn,
        w_pow2=(w & (w - 1)) == 0)

    out = pl.pallas_call(
        kernel,
        out_shape=jax.ShapeDtypeStruct((n, d_out, hw), jnp.float32),
        grid_spec=pltpu.PrefetchScalarGridSpec(
            num_scalar_prefetch=0,
            grid=grid,
            in_specs=[
                pl.BlockSpec((bn, c, hw_tile), lambda i, j: (i, 0, j)),
                pl.BlockSpec((bn, c, hw_tile), lambda i, j: (i, 0, j)),
                pl.BlockSpec((d_out, c), lambda i, j: (0, 0)),
                pl.BlockSpec((d_out, c), lambda i, j: (0, 0)),
                pl.BlockSpec((d_out, 1), lambda i, j: (0, 0)),
            ],
            out_specs=pl.BlockSpec((bn, d_out, hw_tile),
                                   lambda i, j: (i, 0, j)),
        ),
        compiler_params=pltpu.CompilerParams(
            # Both axes fully independent -> shard across the 2 TCs on v7x;
            # neutral on single-TC v5e/v6e.
            dimension_semantics=("parallel", "parallel"),
            vmem_limit_bytes=vmem_limit),
    )(obs_p, cond_p, w_obs, w_cond, b2)

    # (N, Dout, HW) is already NCHW-ordered: reshape is a view, no transpose.
    return out.reshape(n, d_out, h, w)


def _reference(obs, cond, weight, bias):
    half = obs.shape[-1] // 2
    cond_mod = cond.at[:, :, :, half:].set(obs[:, :, :, half:])
    cat = jnp.concatenate([obs, cond_mod], axis=1)           # (N, 2C, H, W)
    out = jnp.einsum('nchw,dc->ndhw', cat, weight) + bias[None, :, None, None]
    return out


if __name__ == "__main__":
    N, C, H, W = 2, 4, 16, 16
    D_OUT = 8

    key = jax.random.PRNGKey(0)
    k_obs, k_cond, k_w, k_b = jax.random.split(key, 4)

    obs = jax.random.normal(k_obs, (N, C, H, W), dtype=jnp.float32)
    cond = jax.random.normal(k_cond, (N, C, H, W), dtype=jnp.float32)

    # Deterministic "D" parameters (1x1 Conv2d(2C -> Dout) with bias).
    weight = jax.random.normal(k_w, (D_OUT, 2 * C), dtype=jnp.float32) * 0.1
    bias = jax.random.normal(k_b, (D_OUT,), dtype=jnp.float32) * 0.01

    out = jax.jit(conditional_forward)(obs, cond, weight, bias)
    out = jax.block_until_ready(out)

    ref = _reference(obs, cond, weight, bias)
    assert out.shape == (N, D_OUT, H, W), out.shape
    assert jnp.allclose(out, ref, atol=1e-5, rtol=1e-5), \
        float(jnp.max(jnp.abs(out - ref)))

    print("KERNEL_OK")
</pallas_src>

<mosaic_0001>
module attributes {stable_mosaic.version = 11 : i64} {
  func.func @_conditional_kernel(%arg0: i32, %arg1: i32, %arg2: memref<1x4x256xf32, #tpu.memory_space<vmem>>, %arg3: memref<1x4x256xf32, #tpu.memory_space<vmem>>, %arg4: memref<8x4xf32, #tpu.memory_space<vmem>>, %arg5: memref<8x4xf32, #tpu.memory_space<vmem>>, %arg6: memref<8x1xf32, #tpu.memory_space<vmem>>, %arg7: memref<1x8x256xf32, #tpu.memory_space<vmem>>) attributes {dimension_semantics = [#tpu.dimension_semantics<parallel>, #tpu.dimension_semantics<parallel>], iteration_bounds = array<i64: 2, 1>, scalar_prefetch = 0 : i64, scratch_operands = 0 : i64, tpu.core_type = #tpu.core_type<tc>, window_params = [{transform_indices = @transform_0, window_bounds = array<i64: 1, 4, 256>}, {transform_indices = @transform_1, window_bounds = array<i64: 1, 4, 256>}, {pipeline_mode = #tpu.pipeline_mode<synchronous>, transform_indices = @transform_2, window_bounds = array<i64: 8, 4>}, {pipeline_mode = #tpu.pipeline_mode<synchronous>, transform_indices = @transform_3, window_bounds = array<i64: 8, 4>}, {pipeline_mode = #tpu.pipeline_mode<synchronous>, transform_indices = @transform_4, window_bounds = array<i64: 8, 1>}, {transform_indices = @transform_5, window_bounds = array<i64: 1, 8, 256>}]} {
    %c256_i32 = arith.constant 256 : i32
    %0 = arith.muli %arg1, %c256_i32 : i32
    %1 = tpu.iota {dimensions = array<i32: 1>} : vector<1x256xi32>
    %2 = vector.broadcast %0 : i32 to vector<1x256xi32>
    %3 = arith.addi %2, %1 : vector<1x256xi32>
    %c15_i32 = arith.constant 15 : i32
    %4 = vector.broadcast %c15_i32 : i32 to vector<1x256xi32>
    %5 = arith.andi %3, %4 : vector<1x256xi32>
    %c8_i32 = arith.constant 8 : i32
    %6 = vector.broadcast %c8_i32 : i32 to vector<1x256xi32>
    %7 = arith.cmpi sge, %5, %6 : vector<1x256xi32>
    %c0 = arith.constant 0 : index
    %c0_0 = arith.constant 0 : index
    %8 = vector.load %arg4[%c0, %c0_0] : memref<8x4xf32, #tpu.memory_space<vmem>>, vector<8x4xf32>
    %c0_1 = arith.constant 0 : index
    %c0_2 = arith.constant 0 : index
    %9 = vector.load %arg5[%c0_1, %c0_2] : memref<8x4xf32, #tpu.memory_space<vmem>>, vector<8x4xf32>
    %c0_3 = arith.constant 0 : index
    %c0_4 = arith.constant 0 : index
    %10 = vector.load %arg6[%c0_3, %c0_4] : memref<8x1xf32, #tpu.memory_space<vmem>>, vector<8x1xf32>
    %c0_5 = arith.constant 0 : index
    %c0_6 = arith.constant 0 : index
    %c0_7 = arith.constant 0 : index
    %11 = vector.load %arg2[%c0_5, %c0_6, %c0_7] : memref<1x4x256xf32, #tpu.memory_space<vmem>>, vector<1x4x256xf32>
    %12 = vector.shape_cast %11 : vector<1x4x256xf32> to vector<4x256xf32>
    %c0_8 = arith.constant 0 : index
    %c0_9 = arith.constant 0 : index
    %c0_10 = arith.constant 0 : index
    %13 = vector.load %arg3[%c0_8, %c0_9, %c0_10] : memref<1x4x256xf32, #tpu.memory_space<vmem>>, vector<1x4x256xf32>
    %14 = vector.shape_cast %13 : vector<1x4x256xf32> to vector<4x256xf32>
    %15 = vector.shape_cast %7 : vector<1x256xi1> to vector<1x256xi1>
    %16 = vector.broadcast %15 : vector<1x256xi1> to vector<4x256xi1>
    %17 = arith.select %16, %12, %14 : vector<4x256xi1>, vector<4x256xf32>
    %cst = arith.constant dense<0.000000e+00> : vector<8x256xf32>
    %18 = tpu.matmul %8, %12, %cst {dimension_numbers = #tpu.dot_dimension_numbers<[1], [0], [0], [1], [0, 0, 1, 1], [], []>} : vector<8x4xf32>, vector<4x256xf32>, vector<8x256xf32> -> vector<8x256xf32>
    %cst_11 = arith.constant dense<0.000000e+00> : vector<8x256xf32>
    %19 = tpu.matmul %9, %17, %cst_11 {dimension_numbers = #tpu.dot_dimension_numbers<[1], [0], [0], [1], [0, 0, 1, 1], [], []>} : vector<8x4xf32>, vector<4x256xf32>, vector<8x256xf32> -> vector<8x256xf32>
    %20 = arith.addf %18, %19 : vector<8x256xf32>
    %21 = vector.broadcast %10 : vector<8x1xf32> to vector<8x256xf32>
    %22 = arith.addf %20, %21 : vector<8x256xf32>
    %c0_12 = arith.constant 0 : index
    %c0_13 = arith.constant 0 : index
    %c0_14 = arith.constant 0 : index
    %23 = vector.load %arg7[%c0_12, %c0_13, %c0_14] : memref<1x8x256xf32, #tpu.memory_space<vmem>>, vector<1x8x256xf32>
    %24 = vector.shape_cast %23 : vector<1x8x256xf32> to vector<8x256xf32>
    %25 = vector.shape_cast %22 : vector<8x256xf32> to vector<1x8x256xf32>
    tpu.vector_store %arg7[%c0_12, %c0_13, %c0_14], %25 {strides = array<i32>} : memref<1x8x256xf32, #tpu.memory_space<vmem>>, vector<1x8x256xf32>,
    return
  }
  func.func @transform_0(%arg0: i32, %arg1: i32) -> (i32, i32, i32) {
    %c0_i32 = arith.constant 0 : i32
    %c0_i32_0 = arith.constant 0 : i32
    return %arg0, %c0_i32, %arg1 : i32, i32, i32
  }
  func.func @transform_1(%arg0: i32, %arg1: i32) -> (i32, i32, i32) {
    %c0_i32 = arith.constant 0 : i32
    %c0_i32_0 = arith.constant 0 : i32
    return %arg0, %c0_i32, %arg1 : i32, i32, i32
  }
  func.func @transform_2(%arg0: i32, %arg1: i32) -> (i32, i32) {
    %c0_i32 = arith.constant 0 : i32
    %c0_i32_0 = arith.constant 0 : i32
    %c0_i32_1 = arith.constant 0 : i32
    return %c0_i32, %c0_i32_0 : i32, i32
  }
  func.func @transform_3(%arg0: i32, %arg1: i32) -> (i32, i32) {
    %c0_i32 = arith.constant 0 : i32
    %c0_i32_0 = arith.constant 0 : i32
    %c0_i32_1 = arith.constant 0 : i32
    return %c0_i32, %c0_i32_0 : i32, i32
  }
  func.func @transform_4(%arg0: i32, %arg1: i32) -> (i32, i32) {
    %c0_i32 = arith.constant 0 : i32
    %c0_i32_0 = arith.constant 0 : i32
    %c0_i32_1 = arith.constant 0 : i32
    return %c0_i32, %c0_i32_0 : i32, i32
  }
  func.func @transform_5(%arg0: i32, %arg1: i32) -> (i32, i32, i32) {
    %c0_i32 = arith.constant 0 : i32
    %c0_i32_0 = arith.constant 0 : i32
    return %arg0, %c0_i32, %arg1 : i32, i32, i32
  }
}

</mosaic_0001>

<llo_original>
// kernel: conditional_forward.1
$region0: #{conditional_forward.1}
  #allocation0 [shape = 'u32[]', space=smem, size = 0x4, offset = 0x4, fixed_abs, tag = 'smem constant byte address 0x4 - core index']
  #allocation1 [shape = 'u32[144,128]{1,0:T(1,128)}', space=vmem, size = 0x12000, scoped, tag = 'internal scratch']
  %s0 = inlined_call_operand.vmem [shape: f32[2,4,256], index: 0, kind: input, shape index: {}]
  %s1 = inlined_call_operand.vmem [shape: f32[2,4,256], index: 1, kind: input, shape index: {}]
  %s2 = inlined_call_operand.vmem [shape: f32[8,4], index: 2, kind: input, shape index: {}]
  %s3 = inlined_call_operand.vmem [shape: f32[8,4], index: 3, kind: input, shape index: {}]
  %s4 = inlined_call_operand.vmem [shape: f32[8,1], index: 4, kind: input, shape index: {}]
  %s5 = inlined_call_operand.vmem [shape: f32[2,8,256], index: 5, kind: output, shape index: {}]
  %s6 = sld [smem:[#allocation0]]
  $region53: #{conditional_forward.1} parent=0
    _
  %s8 = ssub.s32 1, %s6
  %s9 = scalar_select 0, %s8, %s6
  loop: start=0, step=1, limit=4
  $region2: #{conditional_forward.1} parent=0 // loop_pre_header
    _
  $region3: #{conditional_forward.1} parent=0 // loop_header
    %s11 = sphi 0, %s15
    %p12 = scmp.ge.s32.totalorder %s11, 4
    %s18 = sphi 0, %s30
    %s19 = sphi 0, %s26
    %s20 = sphi 0, %s18
    %s21 = sphi 0, %s19
    %s22 = sphi 0, %s20
    %s23 = sphi 0, %s21
    %s35 = sphi 0, %s37
    %s38 = sphi 0, %s35
    %s39 = sphi 0, %s38
    %s55 = sphi 0, %s39
    %s63 = sphi 0, %s65
    %s66 = sphi 0, %s63
    %s67 = sphi 0, %s66
    %s83 = sphi 0, %s67
    %s87 = sphi 0, %s87
    %s89 = sphi 0, %s87
    %s90 = sphi 0, %s89
    %s104 = sphi 0, %s90
    %s108 = sphi 0, %s108
    %s110 = sphi 0, %s108
    %s111 = sphi 0, %s110
    %s125 = sphi 0, %s111
    %s129 = sphi 0, %s129
    %s131 = sphi 0, %s129
    %s132 = sphi 0, %s131
    %s146 = sphi 0, %s132
    %s154 = sphi 0, %s156
    %s157 = sphi 0, %s154
    %s158 = sphi 0, %s157
    %s174 = sphi 0, %s158
  $region4: #{conditional_forward.1} parent=0 // loop_header_branch
    %14 = sbr.rel (%p12) target = $region8
  $region5: #{conditional_forward.1} parent=0 // loop_body
    %s16 = ssub.s32 %s11, 1
    %s17 = ssub.s32 %s11, 2
    %s24 = sadd.s32 1, %s19
    %p25 = scmp.ge.s32.totalorder %s24, 1
    %s26 = scalar_select %p25, 0, %s24
    %s27 = sadd.s32 1, %s18
    %s28 = scalar_select %p25, %s27, %s18
    %p29 = scmp.ge.s32.totalorder %s28, 2
    %s30 = scalar_select %p29, 0, %s28
    %s31 = ssub.s32 %s18, %s30
    %s32 = ssub.s32 %s19, %s26
    %s33 = sor.u32 %s31, %s32
    %p34 = scmp.eq.s32.totalorder %s33, 0
    %s36 = sadd.s32 %s35, 1
    %s37 = scalar_select %p34, %s35, %s36
    %p40 = pneg %p34
    %p41 = scmp.eq.s32.totalorder %s11, 1
    %p42 = por %p40, %p41
    %p43 = scmp.ne.s32.totalorder %s35, %s38
    %p44 = scmp.eq.s32.totalorder %s11, 0
    %p45 = por %p43, %p44
    %p46 = scmp.ne.s32.totalorder %s35, %s38
    %p47 = scmp.eq.s32.totalorder %s16, 1
    %p48 = por %p46, %p47
    %p49 = scmp.ne.s32.totalorder %s38, %s39
    %p50 = scmp.eq.s32.totalorder %s16, 0
    %p51 = por %p49, %p50
    %p52 = scmp.ne.s32.totalorder %s38, %s39
    %p53 = scmp.eq.s32.totalorder %s17, 1
    %p54 = por %p52, %p53
    %p56 = scmp.ne.s32.totalorder %s39, %s55
    %p57 = scmp.eq.s32.totalorder %s17, 0
    %p58 = por %p56, %p57
    %s59 = ssub.s32 %s18, %s30
    %s60 = ssub.s32 %s19, %s26
    %s61 = sor.u32 %s59, %s60
    %p62 = scmp.eq.s32.totalorder %s61, 0
    %s64 = sadd.s32 %s63, 1
    %s65 = scalar_select %p62, %s63, %s64
    %p68 = pneg %p62
    %p69 = scmp.eq.s32.totalorder %s11, 1
    %p70 = por %p68, %p69
    %p71 = scmp.ne.s32.totalorder %s63, %s66
    %p72 = scmp.eq.s32.totalorder %s11, 0
    %p73 = por %p71, %p72
    %p74 = scmp.ne.s32.totalorder %s63, %s66
    %p75 = scmp.eq.s32.totalorder %s16, 1
    %p76 = por %p74, %p75
    %p77 = scmp.ne.s32.totalorder %s66, %s67
    %p78 = scmp.eq.s32.totalorder %s16, 0
    %p79 = por %p77, %p78
    %p80 = scmp.ne.s32.totalorder %s66, %s67
    %p81 = scmp.eq.s32.totalorder %s17, 1
    %p82 = por %p80, %p81
    %p84 = scmp.ne.s32.totalorder %s67, %s83
    %p85 = scmp.eq.s32.totalorder %s17, 0
    %p86 = por %p84, %p85
    %s88 = sadd.s32 %s87, 1
    %p91 = scmp.eq.s32.totalorder %s11, 1
    %p92 = scmp.ne.s32.totalorder %s87, %s89
    %p93 = scmp.eq.s32.totalorder %s11, 0
    %p94 = por %p92, %p93
    %p95 = scmp.ne.s32.totalorder %s87, %s89
    %p96 = scmp.eq.s32.totalorder %s16, 1
    %p97 = por %p95, %p96
    %p98 = scmp.ne.s32.totalorder %s89, %s90
    %p99 = scmp.eq.s32.totalorder %s16, 0
    %p100 = por %p98, %p99
    %p101 = scmp.ne.s32.totalorder %s89, %s90
    %p102 = scmp.eq.s32.totalorder %s17, 1
    %p103 = por %p101, %p102
    %p105 = scmp.ne.s32.totalorder %s90, %s104
    %p106 = scmp.eq.s32.totalorder %s17, 0
    %p107 = por %p105, %p106
    %s109 = sadd.s32 %s108, 1
    %p112 = scmp.eq.s32.totalorder %s11, 1
    %p113 = scmp.ne.s32.totalorder %s108, %s110
    %p114 = scmp.eq.s32.totalorder %s11, 0
    %p115 = por %p113, %p114
    %p116 = scmp.ne.s32.totalorder %s108, %s110
    %p117 = scmp.eq.s32.totalorder %s16, 1
    %p118 = por %p116, %p117
    %p119 = scmp.ne.s32.totalorder %s110, %s111
    %p120 = scmp.eq.s32.totalorder %s16, 0
    %p121 = por %p119, %p120
    %p122 = scmp.ne.s32.totalorder %s110, %s111
    %p123 = scmp.eq.s32.totalorder %s17, 1
    %p124 = por %p122, %p123
    %p126 = scmp.ne.s32.totalorder %s111, %s125
    %p127 = scmp.eq.s32.totalorder %s17, 0
    %p128 = por %p126, %p127
    %s130 = sadd.s32 %s129, 1
    %p133 = scmp.eq.s32.totalorder %s11, 1
    %p134 = scmp.ne.s32.totalorder %s129, %s131
    %p135 = scmp.eq.s32.totalorder %s11, 0
    %p136 = por %p134, %p135
    %p137 = scmp.ne.s32.totalorder %s129, %s131
    %p138 = scmp.eq.s32.totalorder %s16, 1
    %p139 = por %p137, %p138
    %p140 = scmp.ne.s32.totalorder %s131, %s132
    %p141 = scmp.eq.s32.totalorder %s16, 0
    %p142 = por %p140, %p141
    %p143 = scmp.ne.s32.totalorder %s131, %s132
    %p144 = scmp.eq.s32.totalorder %s17, 1
    %p145 = por %p143, %p144
    %p147 = scmp.ne.s32.totalorder %s132, %s146
    %p148 = scmp.eq.s32.totalorder %s17, 0
    %p149 = por %p147, %p148
    %s150 = ssub.s32 %s18, %s30
    %s151 = ssub.s32 %s19, %s26
    %s152 = sor.u32 %s150, %s151
    %p153 = scmp.eq.s32.totalorder %s152, 0
    %s155 = sadd.s32 %s154, 1
    %s156 = scalar_select %p153, %s154, %s155
    %p159 = pneg %p153
    %p160 = scmp.eq.s32.totalorder %s11, 1
    %p161 = por %p159, %p160
    %p162 = scmp.ne.s32.totalorder %s154, %s157
    %p163 = scmp.eq.s32.totalorder %s11, 0
    %p164 = por %p162, %p163
    %p165 = scmp.ne.s32.totalorder %s154, %s157
    %p166 = scmp.eq.s32.totalorder %s16, 1
    %p167 = por %p165, %p166
    %p168 = scmp.ne.s32.totalorder %s157, %s158
    %p169 = scmp.eq.s32.totalorder %s16, 0
    %p170 = por %p168, %p169
    %p171 = scmp.ne.s32.totalorder %s157, %s158
    %p172 = scmp.eq.s32.totalorder %s17, 1
    %p173 = por %p171, %p172
    %p175 = scmp.ne.s32.totalorder %s158, %s174
    %p176 = scmp.eq.s32.totalorder %s17, 0
    %p177 = por %p175, %p176
    %p178 = scmp.le.s32.totalorder 1, %s11
    %p179 = scmp.lt.s32.totalorder %s11, 3
    %p180 = pnand %p178, %p179
    %p181 = pneg %p180
    // Predicated region
    $region9: #{conditional_forward.1} parent=5 // pred_check
      _
    $region10: #{conditional_forward.1} parent=5 // pred_check_branch
      %183 = sbr.rel (%p180) target = $region12
    $region11: #{conditional_forward.1} parent=5 // pred_region
      %s184 = ssub.s32 %s11, 1
      // Predicated region
      $region13: #{conditional_forward.1} parent=11 // pred_check
        %p185 = pneg %p100
      $region14: #{conditional_forward.1} parent=11 // pred_check_branch
        %187 = sbr.rel (%p185) target = $region16
      $region15: #{conditional_forward.1} parent=11 // pred_region
        _
      $region16: #{conditional_forward.1} parent=11 // pred_fallthru
        _
      // Predicated region
      $region17: #{conditional_forward.1} parent=11 // pred_check
        %p188 = pneg %p121
      $region18: #{conditional_forward.1} parent=11 // pred_check_branch
        %190 = sbr.rel (%p188) target = $region20
      $region19: #{conditional_forward.1} parent=11 // pred_region
        _
      $region20: #{conditional_forward.1} parent=11 // pred_fallthru
        _
      // Predicated region
      $region21: #{conditional_forward.1} parent=11 // pred_check
        %p191 = pneg %p142
      $region22: #{conditional_forward.1} parent=11 // pred_check_branch
        %193 = sbr.rel (%p191) target = $region24
      $region23: #{conditional_forward.1} parent=11 // pred_region
        _
      $region24: #{conditional_forward.1} parent=11 // pred_fallthru
        _
    $region12: #{conditional_forward.1} parent=5 // pred_fallthru
      _
    %p194 = scmp.lt.s32.totalorder %s11, 2
    // Predicated region
    $region25: #{conditional_forward.1} parent=5 // pred_check
      %p195 = pneg %p194
    $region26: #{conditional_forward.1} parent=5 // pred_check_branch
      %197 = sbr.rel (%p195) target = $region28
    $region27: #{conditional_forward.1} parent=5 // pred_region
      // Predicated region
      $region29: #{conditional_forward.1} parent=27 // pred_check
        %p198 = pneg %p45
      $region30: #{conditional_forward.1} parent=27 // pred_check_branch
        %200 = sbr.rel (%p198) target = $region32
      $region31: #{conditional_forward.1} parent=27 // pred_region
        %s201 = smul.u32 2, %s19
        %p202 = scmp.lt.s32.totalorder %s18, 1
        %s203 = scalar_select %p202, %s18, 1
        %p204 = scmp.lt.s32.totalorder %s201, 1
        %s205 = scalar_select %p204, %s201, 1
        %s206 = smul.addr %s203, 2
        %s207 = sadd.s32 %s205, %s206
        %s208 = smul.addr %s207, 4
        %s209 = scalar_lea.vmem %s0, %s208
        %s210 = smul.u32 2, %s19
      $region32: #{conditional_forward.1} parent=27 // pred_fallthru
        _
      // Predicated region
      $region33: #{conditional_forward.1} parent=27 // pred_check
        %p211 = pneg %p73
      $region34: #{conditional_forward.1} parent=27 // pred_check_branch
        %213 = sbr.rel (%p211) target = $region36
      $region35: #{conditional_forward.1} parent=27 // pred_region
        %s214 = smul.u32 2, %s19
        %p215 = scmp.lt.s32.totalorder %s18, 1
        %s216 = scalar_select %p215, %s18, 1
        %p217 = scmp.lt.s32.totalorder %s214, 1
        %s218 = scalar_select %p217, %s214, 1
        %s219 = smul.addr %s216, 2
        %s220 = sadd.s32 %s218, %s219
        %s221 = smul.addr %s220, 4
        %s222 = scalar_lea.vmem %s1, %s221
        %s223 = smul.u32 2, %s19
      $region36: #{conditional_forward.1} parent=27 // pred_fallthru
        _
    $region28: #{conditional_forward.1} parent=5 // pred_fallthru
      _
    %p224 = scmp.le.s32.totalorder 1, %s11
    %p225 = scmp.lt.s32.totalorder %s11, 3
    %p226 = pnand %p224, %p225
    %p227 = pneg %p226
    // Predicated region
    $region37: #{conditional_forward.1} parent=5 // pred_check
      _
    $region38: #{conditional_forward.1} parent=5 // pred_check_branch
      %229 = sbr.rel (%p226) target = $region40
    $region39: #{conditional_forward.1} parent=5 // pred_region
      %s230 = ssub.s32 %s11, 1
      %s231 = smul.u32 2, %s21
      %p232 = scmp.lt.s32.totalorder %s20, 1
      %s233 = scalar_select %p232, %s20, 1
      %p234 = scmp.lt.s32.totalorder %s231, 1
      %s235 = scalar_select %p234, %s231, 1
      %s236 = smul.addr %s233, 2
      %s237 = sadd.s32 %s235, %s236
      %s238 = smul.addr %s237, 4
      %s239 = scalar_lea.vmem %s0, %s238
      %p240 = pneg %p51
      %p241 = pneg %p48
      %s242 = smul.u32 2, %s21
      %p243 = scmp.lt.s32.totalorder %s20, 1
      %s244 = scalar_select %p243, %s20, 1
      %p245 = scmp.lt.s32.totalorder %s242, 1
      %s246 = scalar_select %p245, %s242, 1
      %s247 = smul.addr %s244, 2
      %s248 = sadd.s32 %s246, %s247
      %s249 = smul.addr %s248, 4
      %s250 = scalar_lea.vmem %s1, %s249
      %p251 = pneg %p79
      %p252 = pneg %p76
      %p253 = pneg %p100
      %p254 = pneg %p97
      %p255 = pneg %p121
      %p256 = pneg %p118
      %p257 = pneg %p142
      %p258 = pneg %p139
      %p259 = pneg %p170
      %p260 = pneg %p167
      %s261 = smul.u32 2, %s21
      %p262 = scmp.lt.s32.totalorder %s20, 1
      %s263 = scalar_select %p262, %s20, 1
      %p264 = scmp.lt.s32.totalorder %s261, 1
      %s265 = scalar_select %p264, %s261, 1
      %s266 = smul.addr %s263, 2
      %s267 = sadd.s32 %s265, %s266
      %s268 = smul.addr %s267, 8
      %s269 = scalar_lea.vmem %s5, %s268
      %s270 = smul.u32 2, %s21
      %p271 = scmp.lt.s32.totalorder %s20, 1
      %s272 = scalar_select %p271, %s20, 1
      %p273 = scmp.lt.s32.totalorder %s270, 1
      %s274 = scalar_select %p273, %s270, 1
      %s275 = smul.addr %s272, 2
      %s276 = sadd.s32 %s274, %s275
      %s277 = smul.addr %s276, 4
      %s278 = scalar_lea.vmem %s0, %s277
      %s279 = smul.u32 2, %s21
      %s280 = smul.u32 2, %s21
      %p281 = scmp.lt.s32.totalorder %s20, 1
      %s282 = scalar_select %p281, %s20, 1
      %p283 = scmp.lt.s32.totalorder %s280, 1
      %s284 = scalar_select %p283, %s280, 1
      %s285 = smul.addr %s282, 2
      %s286 = sadd.s32 %s284, %s285
      %s287 = smul.addr %s286, 4
      %s288 = scalar_lea.vmem %s1, %s287
      %s289 = smul.u32 2, %s21
      %s290 = smul.u32 2, %s21
      %p291 = scmp.lt.s32.totalorder %s20, 1
      %s292 = scalar_select %p291, %s20, 1
      %p293 = scmp.lt.s32.totalorder %s290, 1
      %s294 = scalar_select %p293, %s290, 1
      %s295 = smul.addr %s292, 2
      %s296 = sadd.s32 %s294, %s295
      %s297 = smul.addr %s296, 8
      %s298 = scalar_lea.vmem %s5, %s297
      %s299 = smul.u32 2, %s21
      %s300 = smul.u32 %s21, 256
      %v301 = vlaneseq
      %v302 = vand.u32 %v301, 127
      %v303 = vadd.s32 %v302, 128
      %v304 = vstv %s300
      %v305 = vadd.s32 %v304, %v302
      %v306 = vadd.s32 %v304, %v303
      %v307 = vand.u32 %v305, 15
      %v308 = vand.u32 %v306, 15
      %vm309 = vcmp.ge.s32.totalorder %v307, 8
      %vm310 = vcmp.ge.s32.totalorder %v308, 8
      %v311 = vld [vmem:[%s2] sm:$0xff]
      %v312 = vld [vmem:[%s3] sm:$0xff]
      %v313 = vld [vmem:[%s4] sm:$0xff]
      %v314 = vld [vmem:[%s278] sm:$0xff]
      %v315 = vld [vmem:[%s288] sm:$0xff]
      %v316 = vsel %vm309, 1, 0
      %v317 = vsel %vm310, 1, 0
      %vm318 = vcmp.eq.s32.totalorder %v316, 1
      %vm319 = vcmp.eq.s32.totalorder %v317, 1
      %v321 = vcombine.high %v314, %v314
      %v324 = vcombine.high %v315, %v315
      %v326 = vsel %vm318, %v314, %v315
      %v327 = vsel %vm319, %v321, %v324
      %vm328 = vcmask 31744
      %v330 = vsel %vm328, %v312, 0
      %vm332 = vcmask 1043456
      %v334 = vsel %vm332, %v326, 0
      %v337 = vsel %vm332, %v327, 0
      %339 = vmatprep.subr.mxu0 0.0
      %340 = vmatpush1.msra.mxu0 0.0
      %341 = vmatprep.subr.mxu0 0.0
      %342 = vmatpush1.msra.mxu0 0.0
      %343 = vmatprep.subr.mxu0 0.0
      %344 = vmatpush1.msra.mxu0 0.0
      %345 = vmatprep.subr.mxu0 0.0
      %346 = vmatpush1.msra.mxu0 0.0
      %347 = vmatprep.subr.mxu0 0.0
      %348 = vmatpush1.msra.mxu0 0.0
      %349 = vmatprep.subr.mxu0 0.0
      %350 = vmatpush1.msra.mxu0 0.0
      %351 = vmatprep.subr.mxu0 0.0
      %352 = vmatpush1.msra.mxu0 0.0
      %353 = vmatprep.subr.mxu0 0.0
      %354 = vmatpush1.msra.mxu0 0.0
      %355 = vmatprep.subr.mxu0 0.0
      %356 = vmatpush1.msra.mxu0 0.0
      %357 = vmatprep.subr.mxu0 0.0
      %358 = vmatpush1.msra.mxu0 0.0
      %359 = vmatprep.subr.mxu0 0.0
      %360 = vmatpush1.msra.mxu0 0.0
      %361 = vmatprep.subr.mxu0 0.0
      %362 = vmatpush1.msra.mxu0 0.0
      %363 = vmatprep.subr.mxu0 0.0
      %364 = vmatpush1.msra.mxu0 0.0
      %365 = vmatprep.subr.mxu0 0.0
      %366 = vmatpush1.msra.mxu0 0.0
      %367 = vmatprep.subr.mxu0 0.0
      %368 = vmatpush1.msra.mxu0 0.0
      %369 = vmatprep.subr.mxu0 %v337
      %370 = vmatpush1.msra.mxu0 %v334
      %371 = vmatprep.subr.mxu0 0.0
      %372 = vmatpush2.msra.mxu0 0.0
      %373 = vmatprep.subr.mxu0 0.0
      %374 = vmatpush2.msra.mxu0 0.0
      %375 = vmatprep.subr.mxu0 0.0
      %376 = vmatpush2.msra.mxu0 0.0
      %377 = vmatprep.subr.mxu0 0.0
      %378 = vmatpush2.msra.mxu0 0.0
      %379 = vmatprep.subr.mxu0 0.0
      %380 = vmatpush2.msra.mxu0 0.0
      %381 = vmatprep.subr.mxu0 0.0
      %382 = vmatpush2.msra.mxu0 0.0
      %383 = vmatprep.subr.mxu0 0.0
      %384 = vmatpush2.msra.mxu0 0.0
      %385 = vmatprep.subr.mxu0 0.0
      %386 = vmatpush2.msra.mxu0 0.0
      %387 = vmatprep.subr.mxu0 0.0
      %388 = vmatpush2.msra.mxu0 0.0
      %389 = vmatprep.subr.mxu0 0.0
      %390 = vmatpush2.msra.mxu0 0.0
      %391 = vmatprep.subr.mxu0 0.0
      %392 = vmatpush2.msra.mxu0 0.0
      %393 = vmatprep.subr.mxu0 0.0
      %394 = vmatpush2.msra.mxu0 0.0
      %395 = vmatprep.subr.mxu0 0.0
      %396 = vmatpush2.msra.mxu0 0.0
      %397 = vmatprep.subr.mxu0 0.0
      %398 = vmatpush2.msra.mxu0 0.0
      %399 = vmatprep.subr.mxu0 0.0
      %400 = vmatpush2.msra.mxu0 0.0
      %401 = vmatprep.subr.mxu0 0.0
      %402 = vmatpush2.msra.mxu0 0.0
      %403 = vmatprep.mubr.f32.mxu0 0.0
      %404 = vmatmul.mubr.f32.gmra.mxu0 %v330
      %v405 = vpop.f32.mrf.mxu0
      %v406 = vadd.f32 0.0, %v405
      %v407 = vpop.f32.mrf.mxu0
      %v408 = vadd.f32 0.0, %v407
      %409 = vdwg.mxu0
      %v411 = vsel %vm328, %v311, 0
      %v413 = vsel %vm332, %v314, 0
      %v415 = vsel %vm332, %v321, 0
      %417 = vmatprep.subr.mxu0 0.0
      %418 = vmatpush1.msra.mxu0 0.0
      %419 = vmatprep.subr.mxu0 0.0
      %420 = vmatpush1.msra.mxu0 0.0
      %421 = vmatprep.subr.mxu0 0.0
      %422 = vmatpush1.msra.mxu0 0.0
      %423 = vmatprep.subr.mxu0 0.0
      %424 = vmatpush1.msra.mxu0 0.0
      %425 = vmatprep.subr.mxu0 0.0
      %426 = vmatpush1.msra.mxu0 0.0
      %427 = vmatprep.subr.mxu0 0.0
      %428 = vmatpush1.msra.mxu0 0.0
      %429 = vmatprep.subr.mxu0 0.0
      %430 = vmatpush1.msra.mxu0 0.0
      %431 = vmatprep.subr.mxu0 0.0
      %432 = vmatpush1.msra.mxu0 0.0
      %433 = vmatprep.subr.mxu0 0.0
      %434 = vmatpush1.msra.mxu0 0.0
      %435 = vmatprep.subr.mxu0 0.0
      %436 = vmatpush1.msra.mxu0 0.0
      %437 = vmatprep.subr.mxu0 0.0
      %438 = vmatpush1.msra.mxu0 0.0
      %439 = vmatprep.subr.mxu0 0.0
      %440 = vmatpush1.msra.mxu0 0.0
      %441 = vmatprep.subr.mxu0 0.0
      %442 = vmatpush1.msra.mxu0 0.0
      %443 = vmatprep.subr.mxu0 0.0
      %444 = vmatpush1.msra.mxu0 0.0
      %445 = vmatprep.subr.mxu0 0.0
      %446 = vmatpush1.msra.mxu0 0.0
      %447 = vmatprep.subr.mxu0 %v415
      %448 = vmatpush1.msra.mxu0 %v413
      %449 = vmatprep.subr.mxu0 0.0
      %450 = vmatpush2.msra.mxu0 0.0
      %451 = vmatprep.subr.mxu0 0.0
      %452 = vmatpush2.msra.mxu0 0.0
      %453 = vmatprep.subr.mxu0 0.0
      %454 = vmatpush2.msra.mxu0 0.0
      %455 = vmatprep.subr.mxu0 0.0
      %456 = vmatpush2.msra.mxu0 0.0
      %457 = vmatprep.subr.mxu0 0.0
      %458 = vmatpush2.msra.mxu0 0.0
      %459 = vmatprep.subr.mxu0 0.0
      %460 = vmatpush2.msra.mxu0 0.0
      %461 = vmatprep.subr.mxu0 0.0
      %462 = vmatpush2.msra.mxu0 0.0
      %463 = vmatprep.subr.mxu0 0.0
      %464 = vmatpush2.msra.mxu0 0.0
      %465 = vmatprep.subr.mxu0 0.0
      %466 = vmatpush2.msra.mxu0 0.0
      %467 = vmatprep.subr.mxu0 0.0
      %468 = vmatpush2.msra.mxu0 0.0
      %469 = vmatprep.subr.mxu0 0.0
      %470 = vmatpush2.msra.mxu0 0.0
      %471 = vmatprep.subr.mxu0 0.0
      %472 = vmatpush2.msra.mxu0 0.0
      %473 = vmatprep.subr.mxu0 0.0
      %474 = vmatpush2.msra.mxu0 0.0
      %475 = vmatprep.subr.mxu0 0.0
      %476 = vmatpush2.msra.mxu0 0.0
      %477 = vmatprep.subr.mxu0 0.0
      %478 = vmatpush2.msra.mxu0 0.0
      %479 = vmatprep.subr.mxu0 0.0
      %480 = vmatpush2.msra.mxu0 0.0
      %481 = vmatprep.mubr.f32.mxu0 0.0
      %482 = vmatmul.mubr.f32.gmra.mxu0 %v411
      %v483 = vpop.f32.mrf.mxu0
      %v484 = vadd.f32 %v406, %v483
      %v485 = vpop.f32.mrf.mxu0
      %v486 = vadd.f32 %v408, %v485
      %487 = vdwg.mxu0
      %489 = vset.pattern.permute.xlu0 0
      %490 = vperm.xlu0 %489, %v313
      %v491 = vpop.permute.xlu0 %490
      %v493 = vadd.f32 %v484, %v491
      %v494 = vadd.f32 %v486, %v491
      %495 = vst [vmem:[%s298] sm:$0xff] %v493
      %496 = vst [vmem:[%s298 + $0x8] sm:$0xff] %v494
      %s497 = smul.u32 2, %s21
      %p498 = scmp.lt.s32.totalorder %s20, 1
      %s499 = scalar_select %p498, %s20, 1
      %p500 = scmp.lt.s32.totalorder %s497, 1
      %s501 = scalar_select %p500, %s497, 1
      %s502 = smul.addr %s499, 2
      %s503 = sadd.s32 %s501, %s502
      %s504 = smul.addr %s503, 8
      %s505 = scalar_lea.vmem %s5, %s504
      // Predicated region
      $region41: #{conditional_forward.1} parent=39 // pred_check
        %p506 = pneg %p167
      $region42: #{conditional_forward.1} parent=39 // pred_check_branch
        %508 = sbr.rel (%p506) target = $region44
      $region43: #{conditional_forward.1} parent=39 // pred_region
        %s509 = smul.u32 2, %s21
      $region44: #{conditional_forward.1} parent=39 // pred_fallthru
        _
    $region40: #{conditional_forward.1} parent=5 // pred_fallthru
      _
    %p510 = scmp.le.s32.totalorder 2, %s11
    // Predicated region
    $region45: #{conditional_forward.1} parent=5 // pred_check
      %p511 = pneg %p510
    $region46: #{conditional_forward.1} parent=5 // pred_check_branch
      %513 = sbr.rel (%p511) target = $region48
    $region47: #{conditional_forward.1} parent=5 // pred_region
      %s514 = ssub.s32 %s11, 2
      // Predicated region
      $region49: #{conditional_forward.1} parent=47 // pred_check
        %p515 = pneg %p173
      $region50: #{conditional_forward.1} parent=47 // pred_check_branch
        %517 = sbr.rel (%p515) target = $region52
      $region51: #{conditional_forward.1} parent=47 // pred_region
        %s518 = smul.u32 2, %s23
        %p519 = scmp.lt.s32.totalorder %s22, 1
        %s520 = scalar_select %p519, %s22, 1
        %p521 = scmp.lt.s32.totalorder %s518, 1
        %s522 = scalar_select %p521, %s518, 1
        %s523 = smul.addr %s520, 2
        %s524 = sadd.s32 %s522, %s523
        %s525 = smul.addr %s524, 8
        %s526 = scalar_lea.vmem %s5, %s525
      $region52: #{conditional_forward.1} parent=47 // pred_fallthru
        _
    $region48: #{conditional_forward.1} parent=5 // pred_fallthru
      _
  $region6: #{conditional_forward.1} parent=0 // loop_footer
    %s15 = sadd.s32 1, %s11
  $region7: #{conditional_forward.1} parent=0 // loop_footer_branch
    %10 = sbr.rel target = $region3
  $region8: #{conditional_forward.1} parent=0 // loop_exit
    _

</llo_original>
